<compile_context>
chip_gen: v6e
topology: v6e:2x2x1
jax: 0.10.0
libtpu: 0.0.40
codegen_flags: <defaults>
</compile_context>

<pallas_src>
import functools
import math

import jax
import jax.numpy as jnp
from jax import lax
from jax.experimental import pallas as pl
from jax.experimental.pallas import tpu as pltpu

# -------------------- model dims (small, consistent with BertLayer) -----------
B = 2            # batch
S = 8            # sequence length
H = 32           # hidden size
NH = 4           # num attention heads
HD = H // NH     # head dim
I = 64           # intermediate size
LN_EPS = 1e-12   # BertLayerNorm eps
INIT_RANGE = 0.02

NEG_BIG = -1e9   # off-block penalty: exp underflows to exactly 0 before PV matmul


def _layernorm(x, gamma, beta):
    # BertLayerNorm: gamma * (x - mean) / sqrt(var + eps) + beta   (over last dim)
    u = jnp.mean(x, axis=-1, keepdims=True)
    s = jnp.mean((x - u) ** 2, axis=-1, keepdims=True)
    xn = (x - u) * lax.rsqrt(s + LN_EPS)
    return gamma * xn + beta


def _gelu(x):
    # BERT gelu (erf form)
    return x * 0.5 * (1.0 + lax.erf(x / jnp.sqrt(2.0).astype(x.dtype)))


def bert_layer_kernel(
    x_ref,        # [B*S, H]            activations
    key_row_ref,  # [1, NH*B*S]         additive key mask, tiled per head (per-call)
    penalty_ref,  # [B*S, NH*B*S]       static: 0 same-batch, -1e9 cross-batch
    hmask_ref,    # [NH*B*S, H]         static: 1.0 where key-row's head owns the lane
    wstack_ref,   # [4H, H]             rows: wq.T/sqrt(HD) | wk.T | wv.T | wo.T
    wi_ref,       # [H, I]              pre-transposed
    w2_ref,       # [I, H]              pre-transposed
    vecs_ref,     # [9, H]              rows: bq/sqrt(HD), bk, bv, bo, g1, be1, b2, g2, be2
    bi_ref,       # [1, I]
    out_ref,      # [B*S, H]
):
    f32 = jnp.float32
    x = x_ref[...]                                                   # [16, 32]

    vecs = vecs_ref[...]                                             # [9, 32]
    bq = vecs[0:1, :]; bk = vecs[1:2, :]; bv = vecs[2:3, :]
    bo = vecs[3:4, :]; g1 = vecs[4:5, :]; be1 = vecs[5:6, :]
    b2 = vecs[6:7, :]; g2 = vecs[7:8, :]; be2 = vecs[8:9, :]

    w_all = wstack_ref[...]                                          # [128, 32]
    wq_t = w_all[0 * H:1 * H, :]      # already scaled by 1/sqrt(HD)
    wk_t = w_all[1 * H:2 * H, :]
    wv_t = w_all[2 * H:3 * H, :]
    wo_t = w_all[3 * H:4 * H, :]

    hmask = hmask_ref[...]                                           # [64, 32]

    # replicate activations per head along sublanes (rows ordered (h, b, s))
    x_rep = jnp.concatenate([x] * NH, axis=0)                        # [64, 32]

    # ---- projections (Q scaled at pack time; K/V expanded per head) ----------
    q = jnp.dot(x, wq_t, preferred_element_type=f32) + bq            # [16, 32]
    k_exp = (jnp.dot(x_rep, wk_t, preferred_element_type=f32) + bk) * hmask   # [64, 32]
    v_exp = (jnp.dot(x_rep, wv_t, preferred_element_type=f32) + bv) * hmask   # [64, 32]

    # ---- single block-structured scores matmul + single softmax --------------
    dn = (((1,), (1,)), ((), ()))     # contract last dims: q @ k_exp.T without a .T
    scores = lax.dot_general(q, k_exp, dn, preferred_element_type=f32)        # [16, 64]
    scores = scores + penalty_ref[...] + key_row_ref[...]            # one tile-wide add

    m = jnp.max(scores, axis=-1, keepdims=True)                      # one cross-lane reduce
    p = jnp.exp(scores - m)                                          # unnormalized probs

    # ctx comes out directly in head-concatenated [B*S, H] layout; per-head
    # softmax denominators (already broadcast over each head's HD lanes) come
    # from a matmul with the 0/1 head mask.  Per-row max shift cancels exactly.
    ctx = jnp.dot(p, v_exp, preferred_element_type=f32)              # [16, 32]
    denom = jnp.dot(p, hmask, preferred_element_type=f32)            # [16, 32]
    ctx = ctx * pl.reciprocal(denom, approx=True)                    # EUP slot

    # ---- attention output + LN, FFN + LN -------------------------------------
    attn_out = jnp.dot(ctx, wo_t, preferred_element_type=f32) + bo
    # TODO(synk): dropout layers are identity here (inference semantics).
    h1 = _layernorm(attn_out + x, g1, be1)                           # [16, 32]

    inter = _gelu(jnp.dot(h1, wi_ref[...], preferred_element_type=f32) + bi_ref[...])  # [16, 64]
    out2 = jnp.dot(inter, w2_ref[...], preferred_element_type=f32) + b2                # [16, 32]
    out_ref[...] = _layernorm(out2 + h1, g2, be2)


_VMEM_SPEC = pl.BlockSpec(memory_space=pltpu.MemorySpace.VMEM)


def pack_params(params):
    """One-time (init-time) packing: pre-transposed weights + static masks.

    Kept OUT of the jit'd forward so no per-call repacking / HBM round-trips.
    """
    (wq, bq, wk, bk, wv, bv, wo, bo, g1, be1, wi, bi, w2, b2, g2, be2) = params
    inv_sqrt_d = 1.0 / math.sqrt(HD)

    wstack = jnp.concatenate([wq.T * inv_sqrt_d, wk.T, wv.T, wo.T], axis=0)  # [4H, H]
    vecs = jnp.concatenate(
        [bq * inv_sqrt_d, bk, bv, bo, g1, be1, b2, g2, be2], axis=0)         # [9, H]
    wi_t = wi.T                                                              # [H, I]
    w2_t = w2.T                                                              # [I, H]

    # head mask: key row r = (h, b, s) with h = r // (B*S); lane c belongs to head c // HD
    r_h = (jnp.arange(NH * B * S) // (B * S))[:, None]
    c_h = (jnp.arange(H) // HD)[None, :]
    hmask = (r_h == c_h).astype(jnp.float32)                                 # [64, 32]

    # cross-batch penalty: query row b_r = row // S ; key col b_c = (col // S) % B
    b_r = (jnp.arange(B * S) // S)[:, None]
    b_c = ((jnp.arange(NH * B * S) // S) % B)[None, :]
    penalty = jnp.where(b_r == b_c, 0.0, NEG_BIG).astype(jnp.float32)        # [16, 64]

    return (wstack, wi_t, w2_t, vecs, bi, hmask, penalty)


@jax.jit
def vlayer87_forward(x, attn_mask, packed):
    """Pallas implementation of vLayer87.forward: returns (BertLayer(x, mask), mask)."""
    wstack, wi_t, w2_t, vecs, bi, hmask, penalty = packed

    x_flat = x.reshape(B * S, H)
    # additive key mask tiled per head: column index = h*(B*S) + b*S + s
    key_row = jnp.tile(attn_mask.reshape(1, B * S), (1, NH))        # [1, 64]

    out_flat = pl.pallas_call(
        bert_layer_kernel,
        out_shape=jax.ShapeDtypeStruct((B * S, H), jnp.float32),
        in_specs=[_VMEM_SPEC] * 9,
        out_specs=_VMEM_SPEC,
    )(x_flat, key_row, penalty, hmask, wstack, wi_t, w2_t, vecs, bi)

    return out_flat.reshape(B, S, H), attn_mask


def reference_forward(x, attn_mask, params):
    """Pure-JAX reference (same math as the PyTorch module) for a sanity check."""
    (wq, bq, wk, bk, wv, bv, wo, bo, g1, be1, wi, bi, w2, b2, g2, be2) = params
    q = x @ wq.T + bq
    k = x @ wk.T + bk
    v = x @ wv.T + bv

    def split(t):  # [B,S,H] -> [B,NH,S,HD]
        return t.reshape(B, S, NH, HD).transpose(0, 2, 1, 3)

    qh, kh, vh = split(q), split(k), split(v)
    scores = jnp.einsum("bhqd,bhkd->bhqk", qh, kh) / math.sqrt(HD)
    scores = scores + attn_mask  # [B,1,1,S] broadcast
    p = jax.nn.softmax(scores, axis=-1)
    ctx = jnp.einsum("bhqk,bhkd->bhqd", p, vh).transpose(0, 2, 1, 3).reshape(B, S, H)
    attn_out = ctx @ wo.T + bo
    h1 = _layernorm(attn_out + x, g1, be1)
    inter = _gelu(h1 @ wi.T + bi)
    out = _layernorm(inter @ w2.T + b2 + h1, g2, be2)
    return out, attn_mask


def init_params(key):
    ks = jax.random.split(key, 16)
    std = INIT_RANGE
    n = lambda k, shape: std * jax.random.normal(k, shape, dtype=jnp.float32)
    wq = n(ks[0], (H, H)); bq = jnp.zeros((1, H), jnp.float32)
    wk = n(ks[1], (H, H)); bk = jnp.zeros((1, H), jnp.float32)
    wv = n(ks[2], (H, H)); bv = jnp.zeros((1, H), jnp.float32)
    wo = n(ks[3], (H, H)); bo = jnp.zeros((1, H), jnp.float32)
    # init_bert_weights draws gamma/beta from the same normal (per the module code)
    g1 = n(ks[4], (1, H)); be1 = n(ks[5], (1, H))
    wi = n(ks[6], (I, H)); bi = jnp.zeros((1, I), jnp.float32)
    w2 = n(ks[7], (H, I)); b2 = jnp.zeros((1, H), jnp.float32)
    g2 = n(ks[8], (1, H)); be2 = n(ks[9], (1, H))
    return (wq, bq, wk, bk, wv, bv, wo, bo, g1, be1, wi, bi, w2, b2, g2, be2)


if __name__ == "__main__":
    key = jax.random.PRNGKey(0)
    k_x, k_m, k_p = jax.random.split(key, 3)

    x = jax.random.normal(k_x, (B, S, H), dtype=jnp.float32)
    # additive attention mask (0 = attend, -10000 = masked), like extended BERT mask
    keep = (jax.random.uniform(k_m, (B, 1, 1, S)) > 0.2).astype(jnp.float32)
    attn_mask = (1.0 - keep) * -10000.0

    params = init_params(k_p)
    packed = pack_params(params)          # one-time packing, outside the jit'd forward

    out, mask_out = vlayer87_forward(x, attn_mask, packed)
    out = jax.block_until_ready(out)

    ref_out, _ = reference_forward(x, attn_mask, params)
    # slightly relaxed tolerance for the approx-EUP softmax reciprocal
    assert jnp.allclose(out, ref_out, atol=1e-3, rtol=1e-3), "mismatch vs reference"
    assert jnp.array_equal(mask_out, attn_mask)

    print("KERNEL_OK")
</pallas_src>

<mosaic_0001>
module attributes {stable_mosaic.version = 11 : i64} {
  func.func @bert_layer_kernel(%arg0: memref<16x32xf32, #tpu.memory_space<vmem>>, %arg1: memref<1x64xf32, #tpu.memory_space<vmem>>, %arg2: memref<16x64xf32, #tpu.memory_space<vmem>>, %arg3: memref<64x32xf32, #tpu.memory_space<vmem>>, %arg4: memref<128x32xf32, #tpu.memory_space<vmem>>, %arg5: memref<32x64xf32, #tpu.memory_space<vmem>>, %arg6: memref<64x32xf32, #tpu.memory_space<vmem>>, %arg7: memref<9x32xf32, #tpu.memory_space<vmem>>, %arg8: memref<1x64xf32, #tpu.memory_space<vmem>>, %arg9: memref<16x32xf32, #tpu.memory_space<vmem>>) attributes {dimension_semantics = [], scalar_prefetch = 0 : i64, scratch_operands = 0 : i64, tpu.core_type = #tpu.core_type<tc>} {
    %c0 = arith.constant 0 : index
    %c0_0 = arith.constant 0 : index
    %0 = vector.load %arg0[%c0, %c0_0] : memref<16x32xf32, #tpu.memory_space<vmem>>, vector<16x32xf32>
    %c0_1 = arith.constant 0 : index
    %c0_2 = arith.constant 0 : index
    %1 = vector.load %arg7[%c0_1, %c0_2] : memref<9x32xf32, #tpu.memory_space<vmem>>, vector<9x32xf32>
    %2 = vector.extract_strided_slice %1 {offsets = [0, 0], sizes = [1, 32], strides = [1, 1]} : vector<9x32xf32> to vector<1x32xf32>
    %3 = vector.extract_strided_slice %1 {offsets = [1, 0], sizes = [1, 32], strides = [1, 1]} : vector<9x32xf32> to vector<1x32xf32>
    %4 = vector.extract_strided_slice %1 {offsets = [2, 0], sizes = [1, 32], strides = [1, 1]} : vector<9x32xf32> to vector<1x32xf32>
    %5 = vector.extract_strided_slice %1 {offsets = [3, 0], sizes = [1, 32], strides = [1, 1]} : vector<9x32xf32> to vector<1x32xf32>
    %6 = vector.extract_strided_slice %1 {offsets = [4, 0], sizes = [1, 32], strides = [1, 1]} : vector<9x32xf32> to vector<1x32xf32>
    %7 = vector.extract_strided_slice %1 {offsets = [5, 0], sizes = [1, 32], strides = [1, 1]} : vector<9x32xf32> to vector<1x32xf32>
    %8 = vector.extract_strided_slice %1 {offsets = [6, 0], sizes = [1, 32], strides = [1, 1]} : vector<9x32xf32> to vector<1x32xf32>
    %9 = vector.extract_strided_slice %1 {offsets = [7, 0], sizes = [1, 32], strides = [1, 1]} : vector<9x32xf32> to vector<1x32xf32>
    %10 = vector.extract_strided_slice %1 {offsets = [8, 0], sizes = [1, 32], strides = [1, 1]} : vector<9x32xf32> to vector<1x32xf32>
    %c0_3 = arith.constant 0 : index
    %c0_4 = arith.constant 0 : index
    %11 = vector.load %arg4[%c0_3, %c0_4] : memref<128x32xf32, #tpu.memory_space<vmem>>, vector<128x32xf32>
    %12 = vector.extract_strided_slice %11 {offsets = [0, 0], sizes = [32, 32], strides = [1, 1]} : vector<128x32xf32> to vector<32x32xf32>
    %13 = vector.extract_strided_slice %11 {offsets = [32, 0], sizes = [32, 32], strides = [1, 1]} : vector<128x32xf32> to vector<32x32xf32>
    %14 = vector.extract_strided_slice %11 {offsets = [64, 0], sizes = [32, 32], strides = [1, 1]} : vector<128x32xf32> to vector<32x32xf32>
    %15 = vector.extract_strided_slice %11 {offsets = [96, 0], sizes = [32, 32], strides = [1, 1]} : vector<128x32xf32> to vector<32x32xf32>
    %c0_5 = arith.constant 0 : index
    %c0_6 = arith.constant 0 : index
    %16 = vector.load %arg3[%c0_5, %c0_6] : memref<64x32xf32, #tpu.memory_space<vmem>>, vector<64x32xf32>
    %17 = tpu.concatenate %0, %0, %0, %0 in 0 : vector<16x32xf32>, vector<16x32xf32>, vector<16x32xf32>, vector<16x32xf32> -> vector<64x32xf32>
    %cst = arith.constant dense<0.000000e+00> : vector<16x32xf32>
    %18 = tpu.matmul %0, %12, %cst {dimension_numbers = #tpu.dot_dimension_numbers<[1], [0], [0], [1], [0, 0, 1, 1], [], []>} : vector<16x32xf32>, vector<32x32xf32>, vector<16x32xf32> -> vector<16x32xf32>
    %19 = vector.broadcast %2 : vector<1x32xf32> to vector<16x32xf32>
    %20 = arith.addf %18, %19 : vector<16x32xf32>
    %cst_7 = arith.constant dense<0.000000e+00> : vector<64x32xf32>
    %21 = tpu.matmul %17, %13, %cst_7 {dimension_numbers = #tpu.dot_dimension_numbers<[1], [0], [0], [1], [0, 0, 1, 1], [], []>} : vector<64x32xf32>, vector<32x32xf32>, vector<64x32xf32> -> vector<64x32xf32>
    %22 = vector.broadcast %3 : vector<1x32xf32> to vector<64x32xf32>
    %23 = arith.addf %21, %22 : vector<64x32xf32>
    %24 = arith.mulf %23, %16 : vector<64x32xf32>
    %cst_8 = arith.constant dense<0.000000e+00> : vector<64x32xf32>
    %25 = tpu.matmul %17, %14, %cst_8 {dimension_numbers = #tpu.dot_dimension_numbers<[1], [0], [0], [1], [0, 0, 1, 1], [], []>} : vector<64x32xf32>, vector<32x32xf32>, vector<64x32xf32> -> vector<64x32xf32>
    %26 = vector.broadcast %4 : vector<1x32xf32> to vector<64x32xf32>
    %27 = arith.addf %25, %26 : vector<64x32xf32>
    %28 = arith.mulf %27, %16 : vector<64x32xf32>
    %cst_9 = arith.constant dense<0.000000e+00> : vector<16x64xf32>
    %29 = tpu.matmul %20, %24, %cst_9 {dimension_numbers = #tpu.dot_dimension_numbers<[1], [1], [0], [0], [0, 0, 1, 0], [], []>} : vector<16x32xf32>, vector<64x32xf32>, vector<16x64xf32> -> vector<16x64xf32>
    %c0_10 = arith.constant 0 : index
    %c0_11 = arith.constant 0 : index
    %30 = vector.load %arg2[%c0_10, %c0_11] : memref<16x64xf32, #tpu.memory_space<vmem>>, vector<16x64xf32>
    %31 = arith.addf %29, %30 : vector<16x64xf32>
    %c0_12 = arith.constant 0 : index
    %c0_13 = arith.constant 0 : index
    %32 = vector.load %arg1[%c0_12, %c0_13] : memref<1x64xf32, #tpu.memory_space<vmem>>, vector<1x64xf32>
    %33 = vector.broadcast %32 : vector<1x64xf32> to vector<16x64xf32>
    %34 = arith.addf %31, %33 : vector<16x64xf32>
    %cst_14 = arith.constant dense<0xFF800000> : vector<16xf32>
    %35 = vector.multi_reduction <maximumf>, %34, %cst_14 [1] : vector<16x64xf32> to vector<16xf32>
    %36 = vector.shape_cast %35 : vector<16xf32> to vector<16x1xf32>
    %37 = vector.broadcast %36 : vector<16x1xf32> to vector<16x64xf32>
    %38 = arith.subf %34, %37 : vector<16x64xf32>
    %39 = math.exp %38 : vector<16x64xf32>
    %cst_15 = arith.constant dense<0.000000e+00> : vector<16x32xf32>
    %40 = tpu.matmul %39, %28, %cst_15 {dimension_numbers = #tpu.dot_dimension_numbers<[1], [0], [0], [1], [0, 0, 1, 1], [], []>} : vector<16x64xf32>, vector<64x32xf32>, vector<16x32xf32> -> vector<16x32xf32>
    %cst_16 = arith.constant dense<0.000000e+00> : vector<16x32xf32>
    %41 = tpu.matmul %39, %16, %cst_16 {dimension_numbers = #tpu.dot_dimension_numbers<[1], [0], [0], [1], [0, 0, 1, 1], [], []>} : vector<16x64xf32>, vector<64x32xf32>, vector<16x32xf32> -> vector<16x32xf32>
    %42 = tpu.reciprocal %41 {approx = true} : vector<16x32xf32> -> vector<16x32xf32>
    %43 = arith.mulf %40, %42 : vector<16x32xf32>
    %cst_17 = arith.constant dense<0.000000e+00> : vector<16x32xf32>
    %44 = tpu.matmul %43, %15, %cst_17 {dimension_numbers = #tpu.dot_dimension_numbers<[1], [0], [0], [1], [0, 0, 1, 1], [], []>} : vector<16x32xf32>, vector<32x32xf32>, vector<16x32xf32> -> vector<16x32xf32>
    %45 = vector.broadcast %5 : vector<1x32xf32> to vector<16x32xf32>
    %46 = arith.addf %44, %45 : vector<16x32xf32>
    %47 = arith.addf %46, %0 : vector<16x32xf32>
    %cst_18 = arith.constant dense<0.000000e+00> : vector<16xf32>
    %48 = vector.multi_reduction <add>, %47, %cst_18 [1] : vector<16x32xf32> to vector<16xf32>
    %49 = vector.shape_cast %48 : vector<16xf32> to vector<16x1xf32>
    %cst_19 = arith.constant 3.200000e+01 : f32
    %50 = vector.broadcast %cst_19 : f32 to vector<16x1xf32>
    %51 = arith.divf %49, %50 : vector<16x1xf32>
    %52 = vector.broadcast %51 : vector<16x1xf32> to vector<16x32xf32>
    %53 = arith.subf %47, %52 : vector<16x32xf32>
    %54 = arith.mulf %53, %53 : vector<16x32xf32>
    %cst_20 = arith.constant dense<0.000000e+00> : vector<16xf32>
    %55 = vector.multi_reduction <add>, %54, %cst_20 [1] : vector<16x32xf32> to vector<16xf32>
    %56 = vector.shape_cast %55 : vector<16xf32> to vector<16x1xf32>
    %cst_21 = arith.constant 3.200000e+01 : f32
    %57 = vector.broadcast %cst_21 : f32 to vector<16x1xf32>
    %58 = arith.divf %56, %57 : vector<16x1xf32>
    %59 = vector.broadcast %51 : vector<16x1xf32> to vector<16x32xf32>
    %60 = arith.subf %47, %59 : vector<16x32xf32>
    %cst_22 = arith.constant 9.99999996E-13 : f32
    %61 = vector.broadcast %cst_22 : f32 to vector<16x1xf32>
    %62 = arith.addf %58, %61 : vector<16x1xf32>
    %63 = math.rsqrt %62 : vector<16x1xf32>
    %64 = vector.broadcast %63 : vector<16x1xf32> to vector<16x32xf32>
    %65 = arith.mulf %60, %64 : vector<16x32xf32>
    %66 = vector.broadcast %6 : vector<1x32xf32> to vector<16x32xf32>
    %67 = arith.mulf %66, %65 : vector<16x32xf32>
    %68 = vector.broadcast %7 : vector<1x32xf32> to vector<16x32xf32>
    %69 = arith.addf %67, %68 : vector<16x32xf32>
    %c0_23 = arith.constant 0 : index
    %c0_24 = arith.constant 0 : index
    %70 = vector.load %arg5[%c0_23, %c0_24] : memref<32x64xf32, #tpu.memory_space<vmem>>, vector<32x64xf32>
    %cst_25 = arith.constant dense<0.000000e+00> : vector<16x64xf32>
    %71 = tpu.matmul %69, %70, %cst_25 {dimension_numbers = #tpu.dot_dimension_numbers<[1], [0], [0], [1], [0, 0, 1, 1], [], []>} : vector<16x32xf32>, vector<32x64xf32>, vector<16x64xf32> -> vector<16x64xf32>
    %c0_26 = arith.constant 0 : index
    %c0_27 = arith.constant 0 : index
    %72 = vector.load %arg8[%c0_26, %c0_27] : memref<1x64xf32, #tpu.memory_space<vmem>>, vector<1x64xf32>
    %73 = vector.broadcast %72 : vector<1x64xf32> to vector<16x64xf32>
    %74 = arith.addf %71, %73 : vector<16x64xf32>
    %cst_28 = arith.constant 5.000000e-01 : f32
    %75 = vector.broadcast %cst_28 : f32 to vector<16x64xf32>
    %76 = arith.mulf %74, %75 : vector<16x64xf32>
    %cst_29 = arith.constant 2.000000e+00 : f32
    %77 = math.sqrt %cst_29 : f32
    %78 = vector.broadcast %77 : f32 to vector<16x64xf32>
    %79 = arith.divf %74, %78 : vector<16x64xf32>
    %80 = math.erf %79 : vector<16x64xf32>
    %cst_30 = arith.constant 1.000000e+00 : f32
    %81 = vector.broadcast %cst_30 : f32 to vector<16x64xf32>
    %82 = arith.addf %81, %80 : vector<16x64xf32>
    %83 = arith.mulf %76, %82 : vector<16x64xf32>
    %c0_31 = arith.constant 0 : index
    %c0_32 = arith.constant 0 : index
    %84 = vector.load %arg6[%c0_31, %c0_32] : memref<64x32xf32, #tpu.memory_space<vmem>>, vector<64x32xf32>
    %cst_33 = arith.constant dense<0.000000e+00> : vector<16x32xf32>
    %85 = tpu.matmul %83, %84, %cst_33 {dimension_numbers = #tpu.dot_dimension_numbers<[1], [0], [0], [1], [0, 0, 1, 1], [], []>} : vector<16x64xf32>, vector<64x32xf32>, vector<16x32xf32> -> vector<16x32xf32>
    %86 = vector.broadcast %8 : vector<1x32xf32> to vector<16x32xf32>
    %87 = arith.addf %85, %86 : vector<16x32xf32>
    %88 = arith.addf %87, %69 : vector<16x32xf32>
    %cst_34 = arith.constant dense<0.000000e+00> : vector<16xf32>
    %89 = vector.multi_reduction <add>, %88, %cst_34 [1] : vector<16x32xf32> to vector<16xf32>
    %90 = vector.shape_cast %89 : vector<16xf32> to vector<16x1xf32>
    %cst_35 = arith.constant 3.200000e+01 : f32
    %91 = vector.broadcast %cst_35 : f32 to vector<16x1xf32>
    %92 = arith.divf %90, %91 : vector<16x1xf32>
    %93 = vector.broadcast %92 : vector<16x1xf32> to vector<16x32xf32>
    %94 = arith.subf %88, %93 : vector<16x32xf32>
    %95 = arith.mulf %94, %94 : vector<16x32xf32>
    %cst_36 = arith.constant dense<0.000000e+00> : vector<16xf32>
    %96 = vector.multi_reduction <add>, %95, %cst_36 [1] : vector<16x32xf32> to vector<16xf32>
    %97 = vector.shape_cast %96 : vector<16xf32> to vector<16x1xf32>
    %cst_37 = arith.constant 3.200000e+01 : f32
    %98 = vector.broadcast %cst_37 : f32 to vector<16x1xf32>
    %99 = arith.divf %97, %98 : vector<16x1xf32>
    %100 = vector.broadcast %92 : vector<16x1xf32> to vector<16x32xf32>
    %101 = arith.subf %88, %100 : vector<16x32xf32>
    %cst_38 = arith.constant 9.99999996E-13 : f32
    %102 = vector.broadcast %cst_38 : f32 to vector<16x1xf32>
    %103 = arith.addf %99, %102 : vector<16x1xf32>
    %104 = math.rsqrt %103 : vector<16x1xf32>
    %105 = vector.broadcast %104 : vector<16x1xf32> to vector<16x32xf32>
    %106 = arith.mulf %101, %105 : vector<16x32xf32>
    %107 = vector.broadcast %9 : vector<1x32xf32> to vector<16x32xf32>
    %108 = arith.mulf %107, %106 : vector<16x32xf32>
    %109 = vector.broadcast %10 : vector<1x32xf32> to vector<16x32xf32>
    %110 = arith.addf %108, %109 : vector<16x32xf32>
    %c0_39 = arith.constant 0 : index
    %c0_40 = arith.constant 0 : index
    %111 = vector.load %arg9[%c0_39, %c0_40] : memref<16x32xf32, #tpu.memory_space<vmem>>, vector<16x32xf32>
    tpu.vector_store %arg9[%c0_39, %c0_40], %110 {strides = array<i32>} : memref<16x32xf32, #tpu.memory_space<vmem>>, vector<16x32xf32>,
    return
  }
}

</mosaic_0001>

<llo_original>
// kernel: vlayer87_forward.1
$region0: #{vlayer87_forward.1}
  #allocation0 [shape = 'u32[]', space=smem, size = 0x4, offset = 0x4, fixed_abs, tag = 'smem constant byte address 0x4 - core index']
  #allocation1 [shape = 'u32[144,128]{1,0:T(1,128)}', space=vmem, size = 0x12000, scoped, tag = 'internal scratch']
  %s0 = inlined_call_operand.vmem [shape: f32[16,32], index: 0, kind: input, shape index: {}]
  %s1 = inlined_call_operand.vmem [shape: f32[1,64], index: 1, kind: input, shape index: {}]
  %s2 = inlined_call_operand.vmem [shape: f32[16,64], index: 2, kind: input, shape index: {}]
  %s3 = inlined_call_operand.vmem [shape: f32[64,32], index: 3, kind: input, shape index: {}]
  %s4 = inlined_call_operand.vmem [shape: f32[128,32], index: 4, kind: input, shape index: {}]
  %s5 = inlined_call_operand.vmem [shape: f32[32,64], index: 5, kind: input, shape index: {}]
  %s6 = inlined_call_operand.vmem [shape: f32[64,32], index: 6, kind: input, shape index: {}]
  %s7 = inlined_call_operand.vmem [shape: f32[9,32], index: 7, kind: input, shape index: {}]
  %s8 = inlined_call_operand.vmem [shape: f32[1,64], index: 8, kind: input, shape index: {}]
  %s9 = inlined_call_operand.hbm [shape: f32[16,32], index: 9, kind: output, shape index: {}]
  %s10 = sld [smem:[#allocation0]]
  $region46: #{vlayer87_forward.1} parent=0
    _
  %s12 = ssub.s32 1, %s10
  %s13 = scalar_select 0, %s12, %s10
  $region1: #{vlayer87_forward.1} parent=0
    #allocation2 [shape = 'u8[8192]{0}', space=vmem, size = 0x2000, scoped, tag = 'output window, operand 0, single buffered']
    #allocation3 [shape = 's32[1]{0}', space=sflag, size = 0x4, scoped, tag = 'scoped memory for vlayer87_forward.1']
    %14 = vsyncpa [#allocation3], 0
    // Predicated region
    $region2: #{vlayer87_forward.1} parent=1 // pred_check
      _
    $region3: #{vlayer87_forward.1} parent=1 // pred_check_branch
      %16 = sbr.rel (0) target = $region5
    $region4: #{vlayer87_forward.1} parent=1 // pred_region
      _
    $region5: #{vlayer87_forward.1} parent=1 // pred_fallthru
      _
    // Predicated region
    $region6: #{vlayer87_forward.1} parent=1 // pred_check
      _
    $region7: #{vlayer87_forward.1} parent=1 // pred_check_branch
      %18 = sbr.rel (0) target = $region9
    $region8: #{vlayer87_forward.1} parent=1 // pred_region
      _
    $region9: #{vlayer87_forward.1} parent=1 // pred_fallthru
      _
    // Predicated region
    $region10: #{vlayer87_forward.1} parent=1 // pred_check
      _
    $region11: #{vlayer87_forward.1} parent=1 // pred_check_branch
      %20 = sbr.rel (0) target = $region13
    $region12: #{vlayer87_forward.1} parent=1 // pred_region
      _
    $region13: #{vlayer87_forward.1} parent=1 // pred_fallthru
      _
    // Predicated region
    $region14: #{vlayer87_forward.1} parent=1 // pred_check
      _
    $region15: #{vlayer87_forward.1} parent=1 // pred_check_branch
      %22 = sbr.rel (0) target = $region17
    $region16: #{vlayer87_forward.1} parent=1 // pred_region
      _
    $region17: #{vlayer87_forward.1} parent=1 // pred_fallthru
      _
    // Predicated region
    $region18: #{vlayer87_forward.1} parent=1 // pred_check
      _
    $region19: #{vlayer87_forward.1} parent=1 // pred_check_branch
      %24 = sbr.rel (0) target = $region21
    $region20: #{vlayer87_forward.1} parent=1 // pred_region
      _
    $region21: #{vlayer87_forward.1} parent=1 // pred_fallthru
      _
    // Predicated region
    $region22: #{vlayer87_forward.1} parent=1 // pred_check
      _
    $region23: #{vlayer87_forward.1} parent=1 // pred_check_branch
      %26 = sbr.rel (0) target = $region25
    $region24: #{vlayer87_forward.1} parent=1 // pred_region
      _
    $region25: #{vlayer87_forward.1} parent=1 // pred_fallthru
      _
    // Predicated region
    $region26: #{vlayer87_forward.1} parent=1 // pred_check
      _
    $region27: #{vlayer87_forward.1} parent=1 // pred_check_branch
      %28 = sbr.rel (0) target = $region29
    $region28: #{vlayer87_forward.1} parent=1 // pred_region
      _
    $region29: #{vlayer87_forward.1} parent=1 // pred_fallthru
      _
    // Predicated region
    $region30: #{vlayer87_forward.1} parent=1 // pred_check
      _
    $region31: #{vlayer87_forward.1} parent=1 // pred_check_branch
      %30 = sbr.rel (0) target = $region33
    $region32: #{vlayer87_forward.1} parent=1 // pred_region
      _
    $region33: #{vlayer87_forward.1} parent=1 // pred_fallthru
      _
    // Predicated region
    $region34: #{vlayer87_forward.1} parent=1 // pred_check
      _
    $region35: #{vlayer87_forward.1} parent=1 // pred_check_branch
      %32 = sbr.rel (0) target = $region37
    $region36: #{vlayer87_forward.1} parent=1 // pred_region
      _
    $region37: #{vlayer87_forward.1} parent=1 // pred_fallthru
      _
    %v33 = vld [vmem:[%s0] sm:$0xff]
    %v34 = vld [vmem:[%s0 + $0x8] sm:$0xff]
    %v35 = vld [vmem:[%s7] sm:$0xff]
    %v36 = vld [vmem:[%s7 + $0x8] sm:$0x1]
    %v37 = vld [vmem:[%s4] sm:$0xff]
    %v38 = vld [vmem:[%s4 + $0x8] sm:$0xff]
    %v39 = vld [vmem:[%s4 + $0x10] sm:$0xff]
    %v40 = vld [vmem:[%s4 + $0x18] sm:$0xff]
    %v41 = vld [vmem:[%s4 + $0x20] sm:$0xff]
    %v42 = vld [vmem:[%s4 + $0x28] sm:$0xff]
    %v43 = vld [vmem:[%s4 + $0x30] sm:$0xff]
    %v44 = vld [vmem:[%s4 + $0x38] sm:$0xff]
    %v45 = vld [vmem:[%s4 + $0x40] sm:$0xff]
    %v46 = vld [vmem:[%s4 + $0x48] sm:$0xff]
    %v47 = vld [vmem:[%s4 + $0x50] sm:$0xff]
    %v48 = vld [vmem:[%s4 + $0x58] sm:$0xff]
    %v49 = vld [vmem:[%s4 + $0x60] sm:$0xff]
    %v50 = vld [vmem:[%s4 + $0x68] sm:$0xff]
    %v51 = vld [vmem:[%s4 + $0x70] sm:$0xff]
    %v52 = vld [vmem:[%s4 + $0x78] sm:$0xff]
    %v53 = vld [vmem:[%s3] sm:$0xff]
    %v54 = vld [vmem:[%s3 + $0x8] sm:$0xff]
    %v55 = vld [vmem:[%s3 + $0x10] sm:$0xff]
    %v56 = vld [vmem:[%s3 + $0x18] sm:$0xff]
    %v57 = vld [vmem:[%s3 + $0x20] sm:$0xff]
    %v58 = vld [vmem:[%s3 + $0x28] sm:$0xff]
    %v59 = vld [vmem:[%s3 + $0x30] sm:$0xff]
    %v60 = vld [vmem:[%s3 + $0x38] sm:$0xff]
    %v61 = vlaneseq
    %v62 = vshrl.u32 %v61, 7
    %v63 = vsub.s32 0, %v62
    %v64 = vrot.slane %v35, %v63
    %vm65 = vcmask 261120
    %v67 = vsel %vm65, %v33, 0
    %v70 = vsel %vm65, %v34, 0
    %72 = vmatprep.subr.mxu0 0.0
    %73 = vmatpush1.msra.mxu0 0.0
    %74 = vmatprep.subr.mxu0 0.0
    %75 = vmatpush1.msra.mxu0 0.0
    %76 = vmatprep.subr.mxu0 0.0
    %77 = vmatpush1.msra.mxu0 0.0
    %78 = vmatprep.subr.mxu0 0.0
    %79 = vmatpush1.msra.mxu0 0.0
    %80 = vmatprep.subr.mxu0 0.0
    %81 = vmatpush1.msra.mxu0 0.0
    %82 = vmatprep.subr.mxu0 0.0
    %83 = vmatpush1.msra.mxu0 0.0
    %84 = vmatprep.subr.mxu0 0.0
    %85 = vmatpush1.msra.mxu0 0.0
    %86 = vmatprep.subr.mxu0 0.0
    %87 = vmatpush1.msra.mxu0 0.0
    %88 = vmatprep.subr.mxu0 0.0
    %89 = vmatpush1.msra.mxu0 0.0
    %90 = vmatprep.subr.mxu0 0.0
    %91 = vmatpush1.msra.mxu0 0.0
    %92 = vmatprep.subr.mxu0 0.0
    %93 = vmatpush1.msra.mxu0 0.0
    %94 = vmatprep.subr.mxu0 0.0
    %95 = vmatpush1.msra.mxu0 0.0
    %96 = vmatprep.subr.mxu0 0.0
    %97 = vmatpush1.msra.mxu0 %v40
    %98 = vmatprep.subr.mxu0 0.0
    %99 = vmatpush1.msra.mxu0 %v39
    %100 = vmatprep.subr.mxu0 0.0
    %101 = vmatpush1.msra.mxu0 %v38
    %102 = vmatprep.subr.mxu0 0.0
    %103 = vmatpush1.msra.mxu0 %v37
    %104 = vmatprep.subr.mxu0 0.0
    %105 = vmatpush2.msra.mxu0 0.0
    %106 = vmatprep.subr.mxu0 0.0
    %107 = vmatpush2.msra.mxu0 0.0
    %108 = vmatprep.subr.mxu0 0.0
    %109 = vmatpush2.msra.mxu0 0.0
    %110 = vmatprep.subr.mxu0 0.0
    %111 = vmatpush2.msra.mxu0 0.0
    %112 = vmatprep.subr.mxu0 0.0
    %113 = vmatpush2.msra.mxu0 0.0
    %114 = vmatprep.subr.mxu0 0.0
    %115 = vmatpush2.msra.mxu0 0.0
    %116 = vmatprep.subr.mxu0 0.0
    %117 = vmatpush2.msra.mxu0 0.0
    %118 = vmatprep.subr.mxu0 0.0
    %119 = vmatpush2.msra.mxu0 0.0
    %120 = vmatprep.subr.mxu0 0.0
    %121 = vmatpush2.msra.mxu0 0.0
    %122 = vmatprep.subr.mxu0 0.0
    %123 = vmatpush2.msra.mxu0 0.0
    %124 = vmatprep.subr.mxu0 0.0
    %125 = vmatpush2.msra.mxu0 0.0
    %126 = vmatprep.subr.mxu0 0.0
    %127 = vmatpush2.msra.mxu0 0.0
    %128 = vmatprep.subr.mxu0 0.0
    %129 = vmatpush2.msra.mxu0 0.0
    %130 = vmatprep.subr.mxu0 0.0
    %131 = vmatpush2.msra.mxu0 0.0
    %132 = vmatprep.subr.mxu0 0.0
    %133 = vmatpush2.msra.mxu0 0.0
    %134 = vmatprep.subr.mxu0 0.0
    %135 = vmatpush2.msra.mxu0 0.0
    %136 = vmatprep.mubr.f32.mxu0 0.0
    %137 = vmatmul.mubr.f32.gmra.mxu0 %v67
    %v138 = vpop.f32.mrf.mxu0
    %v139 = vadd.f32 %v64, %v138
    %v140 = vpop.f32.mrf.mxu0
    %141 = vmatprep.mubr.f32.mxu0 0.0
    %142 = vmatmul.mubr.f32.gmra.mxu0 %v70
    %v143 = vpop.f32.mrf.mxu0
    %v144 = vadd.f32 %v64, %v143
    %v145 = vpop.f32.mrf.mxu0
    %146 = vdwg.mxu0
    %v147 = vlaneseq
    %v148 = vshrl.u32 %v147, 7
    %v149 = vsub.s32 1, %v148
    %v150 = vrot.slane %v35, %v149
    %151 = vmatprep.subr.mxu0 0.0
    %152 = vmatpush1.msra.mxu0 0.0
    %153 = vmatprep.subr.mxu0 0.0
    %154 = vmatpush1.msra.mxu0 0.0
    %155 = vmatprep.subr.mxu0 0.0
    %156 = vmatpush1.msra.mxu0 0.0
    %157 = vmatprep.subr.mxu0 0.0
    %158 = vmatpush1.msra.mxu0 0.0
    %159 = vmatprep.subr.mxu0 0.0
    %160 = vmatpush1.msra.mxu0 0.0
    %161 = vmatprep.subr.mxu0 0.0
    %162 = vmatpush1.msra.mxu0 0.0
    %163 = vmatprep.subr.mxu0 0.0
    %164 = vmatpush1.msra.mxu0 0.0
    %165 = vmatprep.subr.mxu0 0.0
    %166 = vmatpush1.msra.mxu0 0.0
    %167 = vmatprep.subr.mxu0 0.0
    %168 = vmatpush1.msra.mxu0 0.0
    %169 = vmatprep.subr.mxu0 0.0
    %170 = vmatpush1.msra.mxu0 0.0
    %171 = vmatprep.subr.mxu0 0.0
    %172 = vmatpush1.msra.mxu0 0.0
    %173 = vmatprep.subr.mxu0 0.0
    %174 = vmatpush1.msra.mxu0 0.0
    %175 = vmatprep.subr.mxu0 0.0
    %176 = vmatpush1.msra.mxu0 %v44
    %177 = vmatprep.subr.mxu0 0.0
    %178 = vmatpush1.msra.mxu0 %v43
    %179 = vmatprep.subr.mxu0 0.0
    %180 = vmatpush1.msra.mxu0 %v42
    %181 = vmatprep.subr.mxu0 0.0
    %182 = vmatpush1.msra.mxu0 %v41
    %183 = vmatprep.subr.mxu0 0.0
    %184 = vmatpush2.msra.mxu0 0.0
    %185 = vmatprep.subr.mxu0 0.0
    %186 = vmatpush2.msra.mxu0 0.0
    %187 = vmatprep.subr.mxu0 0.0
    %188 = vmatpush2.msra.mxu0 0.0
    %189 = vmatprep.subr.mxu0 0.0
    %190 = vmatpush2.msra.mxu0 0.0
    %191 = vmatprep.subr.mxu0 0.0
    %192 = vmatpush2.msra.mxu0 0.0
    %193 = vmatprep.subr.mxu0 0.0
    %194 = vmatpush2.msra.mxu0 0.0
    %195 = vmatprep.subr.mxu0 0.0
    %196 = vmatpush2.msra.mxu0 0.0
    %197 = vmatprep.subr.mxu0 0.0
    %198 = vmatpush2.msra.mxu0 0.0
    %199 = vmatprep.subr.mxu0 0.0
    %200 = vmatpush2.msra.mxu0 0.0
    %201 = vmatprep.subr.mxu0 0.0
    %202 = vmatpush2.msra.mxu0 0.0
    %203 = vmatprep.subr.mxu0 0.0
    %204 = vmatpush2.msra.mxu0 0.0
    %205 = vmatprep.subr.mxu0 0.0
    %206 = vmatpush2.msra.mxu0 0.0
    %207 = vmatprep.subr.mxu0 0.0
    %208 = vmatpush2.msra.mxu0 0.0
    %209 = vmatprep.subr.mxu0 0.0
    %210 = vmatpush2.msra.mxu0 0.0
    %211 = vmatprep.subr.mxu0 0.0
    %212 = vmatpush2.msra.mxu0 0.0
    %213 = vmatprep.subr.mxu0 0.0
    %214 = vmatpush2.msra.mxu0 0.0
    %215 = vmatprep.mubr.f32.mxu0 0.0
    %216 = vmatmul.mubr.f32.gmra.mxu0 %v67
    %v217 = vpop.f32.mrf.mxu0
    %v218 = vadd.f32 %v150, %v217
    %v219 = vpop.f32.mrf.mxu0
    %220 = vmatprep.mubr.f32.mxu0 0.0
    %221 = vmatmul.mubr.f32.gmra.mxu0 %v70
    %v222 = vpop.f32.mrf.mxu0
    %v223 = vadd.f32 %v150, %v222
    %v224 = vpop.f32.mrf.mxu0
    %225 = vmatprep.mubr.f32.mxu0 0.0
    %226 = vmatmul.mubr.f32.gmra.mxu0 %v67
    %v227 = vpop.f32.mrf.mxu0
    %v228 = vadd.f32 %v150, %v227
    %v229 = vpop.f32.mrf.mxu0
    %230 = vmatprep.mubr.f32.mxu0 0.0
    %231 = vmatmul.mubr.f32.gmra.mxu0 %v70
    %v232 = vpop.f32.mrf.mxu0
    %v233 = vadd.f32 %v150, %v232
    %v234 = vpop.f32.mrf.mxu0
    %235 = vmatprep.mubr.f32.mxu0 0.0
    %236 = vmatmul.mubr.f32.gmra.mxu0 %v67
    %v237 = vpop.f32.mrf.mxu0
    %v238 = vadd.f32 %v150, %v237
    %v239 = vpop.f32.mrf.mxu0
    %240 = vmatprep.mubr.f32.mxu0 0.0
    %241 = vmatmul.mubr.f32.gmra.mxu0 %v70
    %v242 = vpop.f32.mrf.mxu0
    %v243 = vadd.f32 %v150, %v242
    %v244 = vpop.f32.mrf.mxu0
    %245 = vmatprep.mubr.f32.mxu0 0.0
    %246 = vmatmul.mubr.f32.gmra.mxu0 %v67
    %v247 = vpop.f32.mrf.mxu0
    %v248 = vadd.f32 %v150, %v247
    %v249 = vpop.f32.mrf.mxu0
    %250 = vmatprep.mubr.f32.mxu0 0.0
    %251 = vmatmul.mubr.f32.gmra.mxu0 %v70
    %v252 = vpop.f32.mrf.mxu0
    %v253 = vadd.f32 %v150, %v252
    %v254 = vpop.f32.mrf.mxu0
    %255 = vdwg.mxu0
    %v256 = vmul.f32 %v218, %v53
    %v257 = vmul.f32 %v223, %v54
    %v258 = vmul.f32 %v228, %v55
    %v259 = vmul.f32 %v233, %v56
    %v260 = vmul.f32 %v238, %v57
    %v261 = vmul.f32 %v243, %v58
    %v262 = vmul.f32 %v248, %v59
    %v263 = vmul.f32 %v253, %v60
    %v264 = vlaneseq
    %v265 = vshrl.u32 %v264, 7
    %v266 = vsub.s32 2, %v265
    %v267 = vrot.slane %v35, %v266
    %268 = vmatprep.subr.mxu0 0.0
    %269 = vmatpush1.msra.mxu0 0.0
    %270 = vmatprep.subr.mxu0 0.0
    %271 = vmatpush1.msra.mxu0 0.0
    %272 = vmatprep.subr.mxu0 0.0
    %273 = vmatpush1.msra.mxu0 0.0
    %274 = vmatprep.subr.mxu0 0.0
    %275 = vmatpush1.msra.mxu0 0.0
    %276 = vmatprep.subr.mxu0 0.0
    %277 = vmatpush1.msra.mxu0 0.0
    %278 = vmatprep.subr.mxu0 0.0
    %279 = vmatpush1.msra.mxu0 0.0
    %280 = vmatprep.subr.mxu0 0.0
    %281 = vmatpush1.msra.mxu0 0.0
    %282 = vmatprep.subr.mxu0 0.0
    %283 = vmatpush1.msra.mxu0 0.0
    %284 = vmatprep.subr.mxu0 0.0
    %285 = vmatpush1.msra.mxu0 0.0
    %286 = vmatprep.subr.mxu0 0.0
    %287 = vmatpush1.msra.mxu0 0.0
    %288 = vmatprep.subr.mxu0 0.0
    %289 = vmatpush1.msra.mxu0 0.0
    %290 = vmatprep.subr.mxu0 0.0
    %291 = vmatpush1.msra.mxu0 0.0
    %292 = vmatprep.subr.mxu0 0.0
    %293 = vmatpush1.msra.mxu0 %v48
    %294 = vmatprep.subr.mxu0 0.0
    %295 = vmatpush1.msra.mxu0 %v47
    %296 = vmatprep.subr.mxu0 0.0
    %297 = vmatpush1.msra.mxu0 %v46
    %298 = vmatprep.subr.mxu0 0.0
    %299 = vmatpush1.msra.mxu0 %v45
    %300 = vmatprep.subr.mxu0 0.0
    %301 = vmatpush2.msra.mxu0 0.0
    %302 = vmatprep.subr.mxu0 0.0
    %303 = vmatpush2.msra.mxu0 0.0
    %304 = vmatprep.subr.mxu0 0.0
    %305 = vmatpush2.msra.mxu0 0.0
    %306 = vmatprep.subr.mxu0 0.0
    %307 = vmatpush2.msra.mxu0 0.0
    %308 = vmatprep.subr.mxu0 0.0
    %309 = vmatpush2.msra.mxu0 0.0
    %310 = vmatprep.subr.mxu0 0.0
    %311 = vmatpush2.msra.mxu0 0.0
    %312 = vmatprep.subr.mxu0 0.0
    %313 = vmatpush2.msra.mxu0 0.0
    %314 = vmatprep.subr.mxu0 0.0
    %315 = vmatpush2.msra.mxu0 0.0
    %316 = vmatprep.subr.mxu0 0.0
    %317 = vmatpush2.msra.mxu0 0.0
    %318 = vmatprep.subr.mxu0 0.0
    %319 = vmatpush2.msra.mxu0 0.0
    %320 = vmatprep.subr.mxu0 0.0
    %321 = vmatpush2.msra.mxu0 0.0
    %322 = vmatprep.subr.mxu0 0.0
    %323 = vmatpush2.msra.mxu0 0.0
    %324 = vmatprep.subr.mxu0 0.0
    %325 = vmatpush2.msra.mxu0 0.0
    %326 = vmatprep.subr.mxu0 0.0
    %327 = vmatpush2.msra.mxu0 0.0
    %328 = vmatprep.subr.mxu0 0.0
    %329 = vmatpush2.msra.mxu0 0.0
    %330 = vmatprep.subr.mxu0 0.0
    %331 = vmatpush2.msra.mxu0 0.0
    %332 = vmatprep.mubr.f32.mxu0 0.0
    %333 = vmatmul.mubr.f32.gmra.mxu0 %v67
    %v334 = vpop.f32.mrf.mxu0
    %v335 = vadd.f32 %v267, %v334
    %v336 = vpop.f32.mrf.mxu0
    %337 = vmatprep.mubr.f32.mxu0 0.0
    %338 = vmatmul.mubr.f32.gmra.mxu0 %v70
    %v339 = vpop.f32.mrf.mxu0
    %v340 = vadd.f32 %v267, %v339
    %v341 = vpop.f32.mrf.mxu0
    %342 = vmatprep.mubr.f32.mxu0 0.0
    %343 = vmatmul.mubr.f32.gmra.mxu0 %v67
    %v344 = vpop.f32.mrf.mxu0
    %v345 = vadd.f32 %v267, %v344
    %v346 = vpop.f32.mrf.mxu0
    %347 = vmatprep.mubr.f32.mxu0 0.0
    %348 = vmatmul.mubr.f32.gmra.mxu0 %v70
    %v349 = vpop.f32.mrf.mxu0
    %v350 = vadd.f32 %v267, %v349
    %v351 = vpop.f32.mrf.mxu0
    %352 = vmatprep.mubr.f32.mxu0 0.0
    %353 = vmatmul.mubr.f32.gmra.mxu0 %v67
    %v354 = vpop.f32.mrf.mxu0
    %v355 = vadd.f32 %v267, %v354
    %v356 = vpop.f32.mrf.mxu0
    %357 = vmatprep.mubr.f32.mxu0 0.0
    %358 = vmatmul.mubr.f32.gmra.mxu0 %v70
    %v359 = vpop.f32.mrf.mxu0
    %v360 = vadd.f32 %v267, %v359
    %v361 = vpop.f32.mrf.mxu0
    %362 = vmatprep.mubr.f32.mxu0 0.0
    %363 = vmatmul.mubr.f32.gmra.mxu0 %v67
    %v364 = vpop.f32.mrf.mxu0
    %v365 = vadd.f32 %v267, %v364
    %v366 = vpop.f32.mrf.mxu0
    %367 = vmatprep.mubr.f32.mxu0 0.0
    %368 = vmatmul.mubr.f32.gmra.mxu0 %v70
    %v369 = vpop.f32.mrf.mxu0
    %v370 = vadd.f32 %v267, %v369
    %v371 = vpop.f32.mrf.mxu0
    %372 = vdwg.mxu0
    %v373 = vmul.f32 %v335, %v53
    %v374 = vmul.f32 %v340, %v54
    %v375 = vmul.f32 %v345, %v55
    %v376 = vmul.f32 %v350, %v56
    %v377 = vmul.f32 %v355, %v57
    %v378 = vmul.f32 %v360, %v58
    %v379 = vmul.f32 %v365, %v59
    %v380 = vmul.f32 %v370, %v60
    %v381 = vld [vmem:[%s2] sm:$0xff]
    %v382 = vld [vmem:[%s2 + $0x8] sm:$0xff]
    %v384 = vsel %vm65, %v139, 0
    %v387 = vsel %vm65, %v144, 0
    %v390 = vsel %vm65, %v256, 0
    %v393 = vsel %vm65, %v257, 0
    %v396 = vsel %vm65, %v258, 0
    %v399 = vsel %vm65, %v259, 0
    %v402 = vsel %vm65, %v260, 0
    %v405 = vsel %vm65, %v261, 0
    %v408 = vsel %vm65, %v262, 0
    %v411 = vsel %vm65, %v263, 0
    %413 = vmatprep.subr.mxu0 0.0
    %414 = vmatpush1.xpose.msra.mxu0 0.0
    %415 = vmatprep.subr.mxu0 0.0
    %416 = vmatpush1.xpose.msra.mxu0 0.0
    %417 = vmatprep.subr.mxu0 0.0
    %418 = vmatpush1.xpose.msra.mxu0 0.0
    %419 = vmatprep.subr.mxu0 0.0
    %420 = vmatpush1.xpose.msra.mxu0 0.0
    %421 = vmatprep.subr.mxu0 0.0
    %422 = vmatpush1.xpose.msra.mxu0 0.0
    %423 = vmatprep.subr.mxu0 0.0
    %424 = vmatpush1.xpose.msra.mxu0 0.0
    %425 = vmatprep.subr.mxu0 0.0
    %426 = vmatpush1.xpose.msra.mxu0 0.0
    %427 = vmatprep.subr.mxu0 0.0
    %428 = vmatpush1.xpose.msra.mxu0 0.0
    %429 = vmatprep.subr.mxu0 0.0
    %430 = vmatpush1.xpose.msra.mxu0 %v411
    %431 = vmatprep.subr.mxu0 0.0
    %432 = vmatpush1.xpose.msra.mxu0 %v408
    %433 = vmatprep.subr.mxu0 0.0
    %434 = vmatpush1.xpose.msra.mxu0 %v405
    %435 = vmatprep.subr.mxu0 0.0
    %436 = vmatpush1.xpose.msra.mxu0 %v402
    %437 = vmatprep.subr.mxu0 0.0
    %438 = vmatpush1.xpose.msra.mxu0 %v399
    %439 = vmatprep.subr.mxu0 0.0
    %440 = vmatpush1.xpose.msra.mxu0 %v396
    %441 = vmatprep.subr.mxu0 0.0
    %442 = vmatpush1.xpose.msra.mxu0 %v393
    %443 = vmatprep.subr.mxu0 0.0
    %444 = vmatpush1.xpose.msra.mxu0 %v390
    %445 = vmatprep.subr.mxu0 0.0
    %446 = vmatpush2.xpose.msra.mxu0 0.0
    %447 = vmatprep.subr.mxu0 0.0
    %448 = vmatpush2.xpose.msra.mxu0 0.0
    %449 = vmatprep.subr.mxu0 0.0
    %450 = vmatpush2.xpose.msra.mxu0 0.0
    %451 = vmatprep.subr.mxu0 0.0
    %452 = vmatpush2.xpose.msra.mxu0 0.0
    %453 = vmatprep.subr.mxu0 0.0
    %454 = vmatpush2.xpose.msra.mxu0 0.0
    %455 = vmatprep.subr.mxu0 0.0
    %456 = vmatpush2.xpose.msra.mxu0 0.0
    %457 = vmatprep.subr.mxu0 0.0
    %458 = vmatpush2.xpose.msra.mxu0 0.0
    %459 = vmatprep.subr.mxu0 0.0
    %460 = vmatpush2.xpose.msra.mxu0 0.0
    %461 = vmatprep.subr.mxu0 0.0
    %462 = vmatpush2.xpose.msra.mxu0 0.0
    %463 = vmatprep.subr.mxu0 0.0
    %464 = vmatpush2.xpose.msra.mxu0 0.0
    %465 = vmatprep.subr.mxu0 0.0
    %466 = vmatpush2.xpose.msra.mxu0 0.0
    %467 = vmatprep.subr.mxu0 0.0
    %468 = vmatpush2.xpose.msra.mxu0 0.0
    %469 = vmatprep.subr.mxu0 0.0
    %470 = vmatpush2.xpose.msra.mxu0 0.0
    %471 = vmatprep.subr.mxu0 0.0
    %472 = vmatpush2.xpose.msra.mxu0 0.0
    %473 = vmatprep.subr.mxu0 0.0
    %474 = vmatpush2.xpose.msra.mxu0 0.0
    %475 = vmatprep.subr.mxu0 0.0
    %476 = vmatpush2.xpose.msra.mxu0 0.0
    %477 = vmatprep.mubr.f32.mxu0 0.0
    %478 = vmatmul.mubr.f32.gmra.mxu0 %v384
    %v479 = vpop.f32.mrf.mxu0
    %v480 = vadd.f32 %v381, %v479
    %v481 = vpop.f32.mrf.mxu0
    %482 = vmatprep.mubr.f32.mxu0 0.0
    %483 = vmatmul.mubr.f32.gmra.mxu0 %v387
    %v484 = vpop.f32.mrf.mxu0
    %v485 = vadd.f32 %v382, %v484
    %v486 = vpop.f32.mrf.mxu0
    %487 = vdwg.mxu0
    %v488 = vld [vmem:[%s1] sm:$0x1]
    %v490 = vlaneseq
    %v491 = vshrl.u32 %v490, 7
    %v492 = vsub.s32 0, %v491
    %v493 = vrot.slane %v488, %v492
    %v495 = vadd.f32 %v480, %v493
    %v496 = vadd.f32 %v485, %v493
    %vm497 = vcmask 523264
    %v498 = vsel %vm497, %v495, -inf
    %499 = vmax.xlane.f32.xlu0 %v498
    %v500 = vpop.xlane.xlu0 %499
    %v501 = vsel %vm497, %v496, -inf
    %502 = vmax.xlane.f32.xlu0 %v501
    %v503 = vpop.xlane.xlu0 %502
    %v504 = vsub.f32 %v495, %v500
    %v505 = vsub.f32 %v496, %v503
    %v506 = vmul.f32 %v504, 1.442695
    %v507 = vpow.pop %v506
    %v508 = vmul.f32 %v505, 1.442695
    %v509 = vpow.pop %v508
    %v511 = vsel %vm497, %v507, 0
    %v514 = vsel %vm497, %v509, 0
    %516 = vmatprep.subr.mxu0 0.0
    %517 = vmatpush1.msra.mxu0 0.0
    %518 = vmatprep.subr.mxu0 0.0
    %519 = vmatpush1.msra.mxu0 0.0
    %520 = vmatprep.subr.mxu0 0.0
    %521 = vmatpush1.msra.mxu0 0.0
    %522 = vmatprep.subr.mxu0 0.0
    %523 = vmatpush1.msra.mxu0 0.0
    %524 = vmatprep.subr.mxu0 0.0
    %525 = vmatpush1.msra.mxu0 0.0
    %526 = vmatprep.subr.mxu0 0.0
    %527 = vmatpush1.msra.mxu0 0.0
    %528 = vmatprep.subr.mxu0 0.0
    %529 = vmatpush1.msra.mxu0 0.0
    %530 = vmatprep.subr.mxu0 0.0
    %531 = vmatpush1.msra.mxu0 0.0
    %532 = vmatprep.subr.mxu0 0.0
    %533 = vmatpush1.msra.mxu0 %v380
    %534 = vmatprep.subr.mxu0 0.0
    %535 = vmatpush1.msra.mxu0 %v379
    %536 = vmatprep.subr.mxu0 0.0
    %537 = vmatpush1.msra.mxu0 %v378
    %538 = vmatprep.subr.mxu0 0.0
    %539 = vmatpush1.msra.mxu0 %v377
    %540 = vmatprep.subr.mxu0 0.0
    %541 = vmatpush1.msra.mxu0 %v376
    %542 = vmatprep.subr.mxu0 0.0
    %543 = vmatpush1.msra.mxu0 %v375
    %544 = vmatprep.subr.mxu0 0.0
    %545 = vmatpush1.msra.mxu0 %v374
    %546 = vmatprep.subr.mxu0 0.0
    %547 = vmatpush1.msra.mxu0 %v373
    %548 = vmatprep.subr.mxu0 0.0
    %549 = vmatpush2.msra.mxu0 0.0
    %550 = vmatprep.subr.mxu0 0.0
    %551 = vmatpush2.msra.mxu0 0.0
    %552 = vmatprep.subr.mxu0 0.0
    %553 = vmatpush2.msra.mxu0 0.0
    %554 = vmatprep.subr.mxu0 0.0
    %555 = vmatpush2.msra.mxu0 0.0
    %556 = vmatprep.subr.mxu0 0.0
    %557 = vmatpush2.msra.mxu0 0.0
    %558 = vmatprep.subr.mxu0 0.0
    %559 = vmatpush2.msra.mxu0 0.0
    %560 = vmatprep.subr.mxu0 0.0
    %561 = vmatpush2.msra.mxu0 0.0
    %562 = vmatprep.subr.mxu0 0.0
    %563 = vmatpush2.msra.mxu0 0.0
    %564 = vmatprep.subr.mxu0 0.0
    %565 = vmatpush2.msra.mxu0 0.0
    %566 = vmatprep.subr.mxu0 0.0
    %567 = vmatpush2.msra.mxu0 0.0
    %568 = vmatprep.subr.mxu0 0.0
    %569 = vmatpush2.msra.mxu0 0.0
    %570 = vmatprep.subr.mxu0 0.0
    %571 = vmatpush2.msra.mxu0 0.0
    %572 = vmatprep.subr.mxu0 0.0
    %573 = vmatpush2.msra.mxu0 0.0
    %574 = vmatprep.subr.mxu0 0.0
    %575 = vmatpush2.msra.mxu0 0.0
    %576 = vmatprep.subr.mxu0 0.0
    %577 = vmatpush2.msra.mxu0 0.0
    %578 = vmatprep.subr.mxu0 0.0
    %579 = vmatpush2.msra.mxu0 0.0
    %580 = vmatprep.mubr.f32.mxu0 0.0
    %581 = vmatmul.mubr.f32.gmra.mxu0 %v511
    %v582 = vpop.f32.mrf.mxu0
    %v583 = vadd.f32 0.0, %v582
    %v584 = vpop.f32.mrf.mxu0
    %585 = vmatprep.mubr.f32.mxu0 0.0
    %586 = vmatmul.mubr.f32.gmra.mxu0 %v514
    %v587 = vpop.f32.mrf.mxu0
    %v588 = vadd.f32 0.0, %v587
    %v589 = vpop.f32.mrf.mxu0
    %590 = vdwg.mxu0
    %591 = vmatprep.subr.mxu0 0.0
    %592 = vmatpush1.msra.mxu0 0.0
    %593 = vmatprep.subr.mxu0 0.0
    %594 = vmatpush1.msra.mxu0 0.0
    %595 = vmatprep.subr.mxu0 0.0
    %596 = vmatpush1.msra.mxu0 0.0
    %597 = vmatprep.subr.mxu0 0.0
    %598 = vmatpush1.msra.mxu0 0.0
    %599 = vmatprep.subr.mxu0 0.0
    %600 = vmatpush1.msra.mxu0 0.0
    %601 = vmatprep.subr.mxu0 0.0
    %602 = vmatpush1.msra.mxu0 0.0
    %603 = vmatprep.subr.mxu0 0.0
    %604 = vmatpush1.msra.mxu0 0.0
    %605 = vmatprep.subr.mxu0 0.0
    %606 = vmatpush1.msra.mxu0 0.0
    %607 = vmatprep.subr.mxu0 0.0
    %608 = vmatpush1.msra.mxu0 %v60
    %609 = vmatprep.subr.mxu0 0.0
    %610 = vmatpush1.msra.mxu0 %v59
    %611 = vmatprep.subr.mxu0 0.0
    %612 = vmatpush1.msra.mxu0 %v58
    %613 = vmatprep.subr.mxu0 0.0
    %614 = vmatpush1.msra.mxu0 %v57
    %615 = vmatprep.subr.mxu0 0.0
    %616 = vmatpush1.msra.mxu0 %v56
    %617 = vmatprep.subr.mxu0 0.0
    %618 = vmatpush1.msra.mxu0 %v55
    %619 = vmatprep.subr.mxu0 0.0
    %620 = vmatpush1.msra.mxu0 %v54
    %621 = vmatprep.subr.mxu0 0.0
    %622 = vmatpush1.msra.mxu0 %v53
    %623 = vmatprep.subr.mxu0 0.0
    %624 = vmatpush2.msra.mxu0 0.0
    %625 = vmatprep.subr.mxu0 0.0
    %626 = vmatpush2.msra.mxu0 0.0
    %627 = vmatprep.subr.mxu0 0.0
    %628 = vmatpush2.msra.mxu0 0.0
    %629 = vmatprep.subr.mxu0 0.0
    %630 = vmatpush2.msra.mxu0 0.0
    %631 = vmatprep.subr.mxu0 0.0
    %632 = vmatpush2.msra.mxu0 0.0
    %633 = vmatprep.subr.mxu0 0.0
    %634 = vmatpush2.msra.mxu0 0.0
    %635 = vmatprep.subr.mxu0 0.0
    %636 = vmatpush2.msra.mxu0 0.0
    %637 = vmatprep.subr.mxu0 0.0
    %638 = vmatpush2.msra.mxu0 0.0
    %639 = vmatprep.subr.mxu0 0.0
    %640 = vmatpush2.msra.mxu0 0.0
    %641 = vmatprep.subr.mxu0 0.0
    %642 = vmatpush2.msra.mxu0 0.0
    %643 = vmatprep.subr.mxu0 0.0
    %644 = vmatpush2.msra.mxu0 0.0
    %645 = vmatprep.subr.mxu0 0.0
    %646 = vmatpush2.msra.mxu0 0.0
    %647 = vmatprep.subr.mxu0 0.0
    %648 = vmatpush2.msra.mxu0 0.0
    %649 = vmatprep.subr.mxu0 0.0
    %650 = vmatpush2.msra.mxu0 0.0
    %651 = vmatprep.subr.mxu0 0.0
    %652 = vmatpush2.msra.mxu0 0.0
    %653 = vmatprep.subr.mxu0 0.0
    %654 = vmatpush2.msra.mxu0 0.0
    %655 = vmatprep.mubr.f32.mxu0 0.0
    %656 = vmatmul.mubr.f32.gmra.mxu0 %v511
    %v657 = vpop.f32.mrf.mxu0
    %v658 = vadd.f32 0.0, %v657
    %v659 = vpop.f32.mrf.mxu0
    %660 = vmatprep.mubr.f32.mxu0 0.0
    %661 = vmatmul.mubr.f32.gmra.mxu0 %v514
    %v662 = vpop.f32.mrf.mxu0
    %v663 = vadd.f32 0.0, %v662
    %v664 = vpop.f32.mrf.mxu0
    %665 = vdwg.mxu0
    %v666 = vrcp.pop %v658
    %v667 = vrcp.pop %v663
    %v668 = vmul.f32 %v583, %v666
    %v669 = vmul.f32 %v588, %v667
    %v670 = vlaneseq
    %v671 = vshrl.u32 %v670, 7
    %v672 = vsub.s32 3, %v671
    %v673 = vrot.slane %v35, %v672
    %v675 = vsel %vm65, %v668, 0
    %v678 = vsel %vm65, %v669, 0
    %680 = vmatprep.subr.mxu0 0.0
    %681 = vmatpush1.msra.mxu0 0.0
    %682 = vmatprep.subr.mxu0 0.0
    %683 = vmatpush1.msra.mxu0 0.0
    %684 = vmatprep.subr.mxu0 0.0
    %685 = vmatpush1.msra.mxu0 0.0
    %686 = vmatprep.subr.mxu0 0.0
    %687 = vmatpush1.msra.mxu0 0.0
    %688 = vmatprep.subr.mxu0 0.0
    %689 = vmatpush1.msra.mxu0 0.0
    %690 = vmatprep.subr.mxu0 0.0
    %691 = vmatpush1.msra.mxu0 0.0
    %692 = vmatprep.subr.mxu0 0.0
    %693 = vmatpush1.msra.mxu0 0.0
    %694 = vmatprep.subr.mxu0 0.0
    %695 = vmatpush1.msra.mxu0 0.0
    %696 = vmatprep.subr.mxu0 0.0
    %697 = vmatpush1.msra.mxu0 0.0
    %698 = vmatprep.subr.mxu0 0.0
    %699 = vmatpush1.msra.mxu0 0.0
    %700 = vmatprep.subr.mxu0 0.0
    %701 = vmatpush1.msra.mxu0 0.0
    %702 = vmatprep.subr.mxu0 0.0
    %703 = vmatpush1.msra.mxu0 0.0
    %704 = vmatprep.subr.mxu0 0.0
    %705 = vmatpush1.msra.mxu0 %v52
    %706 = vmatprep.subr.mxu0 0.0
    %707 = vmatpush1.msra.mxu0 %v51
    %708 = vmatprep.subr.mxu0 0.0
    %709 = vmatpush1.msra.mxu0 %v50
    %710 = vmatprep.subr.mxu0 0.0
    %711 = vmatpush1.msra.mxu0 %v49
    %712 = vmatprep.subr.mxu0 0.0
    %713 = vmatpush2.msra.mxu0 0.0
    %714 = vmatprep.subr.mxu0 0.0
    %715 = vmatpush2.msra.mxu0 0.0
    %716 = vmatprep.subr.mxu0 0.0
    %717 = vmatpush2.msra.mxu0 0.0
    %718 = vmatprep.subr.mxu0 0.0
    %719 = vmatpush2.msra.mxu0 0.0
    %720 = vmatprep.subr.mxu0 0.0
    %721 = vmatpush2.msra.mxu0 0.0
    %722 = vmatprep.subr.mxu0 0.0
    %723 = vmatpush2.msra.mxu0 0.0
    %724 = vmatprep.subr.mxu0 0.0
    %725 = vmatpush2.msra.mxu0 0.0
    %726 = vmatprep.subr.mxu0 0.0
    %727 = vmatpush2.msra.mxu0 0.0
    %728 = vmatprep.subr.mxu0 0.0
    %729 = vmatpush2.msra.mxu0 0.0
    %730 = vmatprep.subr.mxu0 0.0
    %731 = vmatpush2.msra.mxu0 0.0
    %732 = vmatprep.subr.mxu0 0.0
    %733 = vmatpush2.msra.mxu0 0.0
    %734 = vmatprep.subr.mxu0 0.0
    %735 = vmatpush2.msra.mxu0 0.0
    %736 = vmatprep.subr.mxu0 0.0
    %737 = vmatpush2.msra.mxu0 0.0
    %738 = vmatprep.subr.mxu0 0.0
    %739 = vmatpush2.msra.mxu0 0.0
    %740 = vmatprep.subr.mxu0 0.0
    %741 = vmatpush2.msra.mxu0 0.0
    %742 = vmatprep.subr.mxu0 0.0
    %743 = vmatpush2.msra.mxu0 0.0
    %744 = vmatprep.mubr.f32.mxu0 0.0
    %745 = vmatmul.mubr.f32.gmra.mxu0 %v675
    %v746 = vpop.f32.mrf.mxu0
    %v747 = vadd.f32 %v673, %v746
    %v748 = vpop.f32.mrf.mxu0
    %749 = vmatprep.mubr.f32.mxu0 0.0
    %750 = vmatmul.mubr.f32.gmra.mxu0 %v678
    %v751 = vpop.f32.mrf.mxu0
    %v752 = vadd.f32 %v673, %v751
    %v753 = vpop.f32.mrf.mxu0
    %754 = vdwg.mxu0
    %v755 = vadd.f32 %v747, %v33
    %v756 = vadd.f32 %v752, %v34
    %v757 = vsel %vm65, %v755, 0.0
    %758 = vadd.xlane.f32.xlu0 %v757
    %v759 = vpop.xlane.xlu0 %758
    %v760 = vsel %vm65, %v756, 0.0
    %761 = vadd.xlane.f32.xlu0 %v760
    %v762 = vpop.xlane.xlu0 %761
    %v763 = vrcp.pop 32.0
    %v764 = vmul.f32 %v759, %v763
    %v765 = vmul.f32 %v762, %v763
    %v766 = vsub.f32 %v755, %v764
    %v767 = vsub.f32 %v756, %v765
    %v768 = vmul.f32 %v766, %v766
    %v769 = vmul.f32 %v767, %v767
    %v770 = vsel %vm65, %v768, 0.0
    %771 = vadd.xlane.f32.xlu0 %v770
    %v772 = vpop.xlane.xlu0 %771
    %v773 = vsel %vm65, %v769, 0.0
    %774 = vadd.xlane.f32.xlu0 %v773
    %v775 = vpop.xlane.xlu0 %774
    %v776 = vmul.f32 %v772, %v763
    %v777 = vmul.f32 %v775, %v763
    %v778 = vadd.f32 %v776, 1e-12
    %v779 = vadd.f32 %v777, 1e-12
    %v780 = vrsqrt.pop %v778
    %v781 = vrsqrt.pop %v779
    %v782 = vmul.f32 %v766, %v780
    %v783 = vmul.f32 %v767, %v781
    %v784 = vlaneseq
    %v785 = vshrl.u32 %v784, 7
    %v786 = vsub.s32 4, %v785
    %v787 = vrot.slane %v35, %v786
    %v788 = vmul.f32 %v787, %v782
    %v789 = vmul.f32 %v787, %v783
    %v790 = vlaneseq
    %v791 = vshrl.u32 %v790, 7
    %v792 = vsub.s32 5, %v791
    %v793 = vrot.slane %v35, %v792
    %v794 = vadd.f32 %v788, %v793
    %v795 = vadd.f32 %v789, %v793
    %v796 = vld [vmem:[%s5] sm:$0xff]
    %v797 = vld [vmem:[%s5 + $0x8] sm:$0xff]
    %v798 = vld [vmem:[%s5 + $0x10] sm:$0xff]
    %v799 = vld [vmem:[%s5 + $0x18] sm:$0xff]
    %v800 = vld [vmem:[%s8] sm:$0x1]
    %v802 = vlaneseq
    %v803 = vshrl.u32 %v802, 7
    %v804 = vsub.s32 0, %v803
    %v805 = vrot.slane %v800, %v804
    %v808 = vsel %vm65, %v794, 0
    %v811 = vsel %vm65, %v795, 0
    %813 = vmatprep.subr.mxu0 0.0
    %814 = vmatpush1.msra.mxu0 0.0
    %815 = vmatprep.subr.mxu0 0.0
    %816 = vmatpush1.msra.mxu0 0.0
    %817 = vmatprep.subr.mxu0 0.0
    %818 = vmatpush1.msra.mxu0 0.0
    %819 = vmatprep.subr.mxu0 0.0
    %820 = vmatpush1.msra.mxu0 0.0
    %821 = vmatprep.subr.mxu0 0.0
    %822 = vmatpush1.msra.mxu0 0.0
    %823 = vmatprep.subr.mxu0 0.0
    %824 = vmatpush1.msra.mxu0 0.0
    %825 = vmatprep.subr.mxu0 0.0
    %826 = vmatpush1.msra.mxu0 0.0
    %827 = vmatprep.subr.mxu0 0.0
    %828 = vmatpush1.msra.mxu0 0.0
    %829 = vmatprep.subr.mxu0 0.0
    %830 = vmatpush1.msra.mxu0 0.0
    %831 = vmatprep.subr.mxu0 0.0
    %832 = vmatpush1.msra.mxu0 0.0
    %833 = vmatprep.subr.mxu0 0.0
    %834 = vmatpush1.msra.mxu0 0.0
    %835 = vmatprep.subr.mxu0 0.0
    %836 = vmatpush1.msra.mxu0 0.0
    %837 = vmatprep.subr.mxu0 0.0
    %838 = vmatpush1.msra.mxu0 %v799
    %839 = vmatprep.subr.mxu0 0.0
    %840 = vmatpush1.msra.mxu0 %v798
    %841 = vmatprep.subr.mxu0 0.0
    %842 = vmatpush1.msra.mxu0 %v797
    %843 = vmatprep.subr.mxu0 0.0
    %844 = vmatpush1.msra.mxu0 %v796
    %845 = vmatprep.subr.mxu0 0.0
    %846 = vmatpush2.msra.mxu0 0.0
    %847 = vmatprep.subr.mxu0 0.0
    %848 = vmatpush2.msra.mxu0 0.0
    %849 = vmatprep.subr.mxu0 0.0
    %850 = vmatpush2.msra.mxu0 0.0
    %851 = vmatprep.subr.mxu0 0.0
    %852 = vmatpush2.msra.mxu0 0.0
    %853 = vmatprep.subr.mxu0 0.0
    %854 = vmatpush2.msra.mxu0 0.0
    %855 = vmatprep.subr.mxu0 0.0
    %856 = vmatpush2.msra.mxu0 0.0
    %857 = vmatprep.subr.mxu0 0.0
    %858 = vmatpush2.msra.mxu0 0.0
    %859 = vmatprep.subr.mxu0 0.0
    %860 = vmatpush2.msra.mxu0 0.0
    %861 = vmatprep.subr.mxu0 0.0
    %862 = vmatpush2.msra.mxu0 0.0
    %863 = vmatprep.subr.mxu0 0.0
    %864 = vmatpush2.msra.mxu0 0.0
    %865 = vmatprep.subr.mxu0 0.0
    %866 = vmatpush2.msra.mxu0 0.0
    %867 = vmatprep.subr.mxu0 0.0
    %868 = vmatpush2.msra.mxu0 0.0
    %869 = vmatprep.subr.mxu0 0.0
    %870 = vmatpush2.msra.mxu0 0.0
    %871 = vmatprep.subr.mxu0 0.0
    %872 = vmatpush2.msra.mxu0 0.0
    %873 = vmatprep.subr.mxu0 0.0
    %874 = vmatpush2.msra.mxu0 0.0
    %875 = vmatprep.subr.mxu0 0.0
    %876 = vmatpush2.msra.mxu0 0.0
    %877 = vmatprep.mubr.f32.mxu0 0.0
    %878 = vmatmul.mubr.f32.gmra.mxu0 %v808
    %v879 = vpop.f32.mrf.mxu0
    %v880 = vadd.f32 %v805, %v879
    %v881 = vpop.f32.mrf.mxu0
    %882 = vmatprep.mubr.f32.mxu0 0.0
    %883 = vmatmul.mubr.f32.gmra.mxu0 %v811
    %v884 = vpop.f32.mrf.mxu0
    %v885 = vadd.f32 %v805, %v884
    %v886 = vpop.f32.mrf.mxu0
    %887 = vdwg.mxu0
    %v888 = vmul.f32 %v880, 0.5
    %v889 = vmul.f32 %v885, 0.5
    %v890 = vrcp.pop 1.4142135
    %v891 = vmul.f32 %v880, %v890
    %v892 = vmul.f32 %v885, %v890
    %v893 = verf.f32.pop %v891
    %v894 = verf.f32.pop %v892
    %v895 = vadd.f32 %v893, 1.0
    %v896 = vadd.f32 %v894, 1.0
    %v897 = vmul.f32 %v888, %v895
    %v898 = vmul.f32 %v889, %v896
    %v899 = vld [vmem:[%s6] sm:$0xff]
    %v900 = vld [vmem:[%s6 + $0x8] sm:$0xff]
    %v901 = vld [vmem:[%s6 + $0x10] sm:$0xff]
    %v902 = vld [vmem:[%s6 + $0x18] sm:$0xff]
    %v903 = vld [vmem:[%s6 + $0x20] sm:$0xff]
    %v904 = vld [vmem:[%s6 + $0x28] sm:$0xff]
    %v905 = vld [vmem:[%s6 + $0x30] sm:$0xff]
    %v906 = vld [vmem:[%s6 + $0x38] sm:$0xff]
    %v907 = vlaneseq
    %v908 = vshrl.u32 %v907, 7
    %v909 = vsub.s32 6, %v908
    %v910 = vrot.slane %v35, %v909
    %v912 = vsel %vm497, %v897, 0
    %v915 = vsel %vm497, %v898, 0
    %917 = vmatprep.subr.mxu0 0.0
    %918 = vmatpush1.msra.mxu0 0.0
    %919 = vmatprep.subr.mxu0 0.0
    %920 = vmatpush1.msra.mxu0 0.0
    %921 = vmatprep.subr.mxu0 0.0
    %922 = vmatpush1.msra.mxu0 0.0
    %923 = vmatprep.subr.mxu0 0.0
    %924 = vmatpush1.msra.mxu0 0.0
    %925 = vmatprep.subr.mxu0 0.0
    %926 = vmatpush1.msra.mxu0 0.0
    %927 = vmatprep.subr.mxu0 0.0
    %928 = vmatpush1.msra.mxu0 0.0
    %929 = vmatprep.subr.mxu0 0.0
    %930 = vmatpush1.msra.mxu0 0.0
    %931 = vmatprep.subr.mxu0 0.0
    %932 = vmatpush1.msra.mxu0 0.0
    %933 = vmatprep.subr.mxu0 0.0
    %934 = vmatpush1.msra.mxu0 %v906
    %935 = vmatprep.subr.mxu0 0.0
    %936 = vmatpush1.msra.mxu0 %v905
    %937 = vmatprep.subr.mxu0 0.0
    %938 = vmatpush1.msra.mxu0 %v904
    %939 = vmatprep.subr.mxu0 0.0
    %940 = vmatpush1.msra.mxu0 %v903
    %941 = vmatprep.subr.mxu0 0.0
    %942 = vmatpush1.msra.mxu0 %v902
    %943 = vmatprep.subr.mxu0 0.0
    %944 = vmatpush1.msra.mxu0 %v901
    %945 = vmatprep.subr.mxu0 0.0
    %946 = vmatpush1.msra.mxu0 %v900
    %947 = vmatprep.subr.mxu0 0.0
    %948 = vmatpush1.msra.mxu0 %v899
    %949 = vmatprep.subr.mxu0 0.0
    %950 = vmatpush2.msra.mxu0 0.0
    %951 = vmatprep.subr.mxu0 0.0
    %952 = vmatpush2.msra.mxu0 0.0
    %953 = vmatprep.subr.mxu0 0.0
    %954 = vmatpush2.msra.mxu0 0.0
    %955 = vmatprep.subr.mxu0 0.0
    %956 = vmatpush2.msra.mxu0 0.0
    %957 = vmatprep.subr.mxu0 0.0
    %958 = vmatpush2.msra.mxu0 0.0
    %959 = vmatprep.subr.mxu0 0.0
    %960 = vmatpush2.msra.mxu0 0.0
    %961 = vmatprep.subr.mxu0 0.0
    %962 = vmatpush2.msra.mxu0 0.0
    %963 = vmatprep.subr.mxu0 0.0
    %964 = vmatpush2.msra.mxu0 0.0
    %965 = vmatprep.subr.mxu0 0.0
    %966 = vmatpush2.msra.mxu0 0.0
    %967 = vmatprep.subr.mxu0 0.0
    %968 = vmatpush2.msra.mxu0 0.0
    %969 = vmatprep.subr.mxu0 0.0
    %970 = vmatpush2.msra.mxu0 0.0
    %971 = vmatprep.subr.mxu0 0.0
    %972 = vmatpush2.msra.mxu0 0.0
    %973 = vmatprep.subr.mxu0 0.0
    %974 = vmatpush2.msra.mxu0 0.0
    %975 = vmatprep.subr.mxu0 0.0
    %976 = vmatpush2.msra.mxu0 0.0
    %977 = vmatprep.subr.mxu0 0.0
    %978 = vmatpush2.msra.mxu0 0.0
    %979 = vmatprep.subr.mxu0 0.0
    %980 = vmatpush2.msra.mxu0 0.0
    %981 = vmatprep.mubr.f32.mxu0 0.0
    %982 = vmatmul.mubr.f32.gmra.mxu0 %v912
    %v983 = vpop.f32.mrf.mxu0
    %v984 = vadd.f32 %v910, %v983
    %v985 = vpop.f32.mrf.mxu0
    %986 = vmatprep.mubr.f32.mxu0 0.0
    %987 = vmatmul.mubr.f32.gmra.mxu0 %v915
    %v988 = vpop.f32.mrf.mxu0
    %v989 = vadd.f32 %v910, %v988
    %v990 = vpop.f32.mrf.mxu0
    %991 = vdwg.mxu0
    %v992 = vadd.f32 %v984, %v794
    %v993 = vadd.f32 %v989, %v795
    %v994 = vsel %vm65, %v992, 0.0
    %995 = vadd.xlane.f32.xlu0 %v994
    %v996 = vpop.xlane.xlu0 %995
    %v997 = vsel %vm65, %v993, 0.0
    %998 = vadd.xlane.f32.xlu0 %v997
    %v999 = vpop.xlane.xlu0 %998
    %v1000 = vmul.f32 %v996, %v763
    %v1001 = vmul.f32 %v999, %v763
    %v1002 = vsub.f32 %v992, %v1000
    %v1003 = vsub.f32 %v993, %v1001
    %v1004 = vmul.f32 %v1002, %v1002
    %v1005 = vmul.f32 %v1003, %v1003
    %v1006 = vsel %vm65, %v1004, 0.0
    %1007 = vadd.xlane.f32.xlu0 %v1006
    %v1008 = vpop.xlane.xlu0 %1007
    %v1009 = vsel %vm65, %v1005, 0.0
    %1010 = vadd.xlane.f32.xlu0 %v1009
    %v1011 = vpop.xlane.xlu0 %1010
    %v1012 = vmul.f32 %v1008, %v763
    %v1013 = vmul.f32 %v1011, %v763
    %v1014 = vadd.f32 %v1012, 1e-12
    %v1015 = vadd.f32 %v1013, 1e-12
    %v1016 = vrsqrt.pop %v1014
    %v1017 = vrsqrt.pop %v1015
    %v1018 = vmul.f32 %v1002, %v1016
    %v1019 = vmul.f32 %v1003, %v1017
    %v1020 = vlaneseq
    %v1021 = vshrl.u32 %v1020, 7
    %v1022 = vsub.s32 7, %v1021
    %v1023 = vrot.slane %v35, %v1022
    %v1024 = vmul.f32 %v1023, %v1018
    %v1025 = vmul.f32 %v1023, %v1019
    %v1026 = vlaneseq
    %v1027 = vshrl.u32 %v1026, 7
    %v1028 = vsub.s32 0, %v1027
    %v1029 = vrot.slane %v36, %v1028
    %v1030 = vadd.f32 %v1024, %v1029
    %v1031 = vadd.f32 %v1025, %v1029
    %1032 = vst.msk [vmem:[#allocation2] sm:$0xff] %vm65, %v1030
    %1033 = vst.msk [vmem:[#allocation2 + $0x8] sm:$0xff] %vm65, %v1031
    // Predicated region
    $region38: #{vlayer87_forward.1} parent=1 // pred_check
      _
    $region39: #{vlayer87_forward.1} parent=1 // pred_check_branch
      %1035 = sbr.rel (0) target = $region41
    $region40: #{vlayer87_forward.1} parent=1 // pred_region
      %s1037 = ssub.s32 256, 256
      %1038 = vsyncadd [#allocation3], %s1037
      %s1039 = sshll.u32 [#allocation2], 4
      %s1040 = int_to_ptr.vmem [resolvable:$true] %s1039
      %1045 = dma.vmem_to_hbm [thread:$0]  %s1040, 256, %s9, [#allocation3], 128, 128, 8
    $region41: #{vlayer87_forward.1} parent=1 // pred_fallthru
      _
    // Predicated region
    $region42: #{vlayer87_forward.1} parent=1 // pred_check
      _
    $region43: #{vlayer87_forward.1} parent=1 // pred_check_branch
      %1047 = sbr.rel (0) target = $region45
    $region44: #{vlayer87_forward.1} parent=1 // pred_region
      %1048 = dma.done [#allocation3], 256
    $region45: #{vlayer87_forward.1} parent=1 // pred_fallthru
      _
    %1049 = vsyncpa [#allocation3], 1

</llo_original>
